<compile_context>
chip_gen: v7x
topology: tpu7x:2x2x1
jax: 0.10.0
libtpu: 0.0.40
codegen_flags: <defaults>
</compile_context>

<pallas_src>
import functools
import math

import jax
import jax.numpy as jnp
from jax.experimental import pallas as pl
from jax.experimental.pallas import tpu as pltpu

LN_EPS = 1e-12           # BERT LayerNorm eps
_NEG_BIAS = -10000.0     # BERT extended attention mask bias
_VMEM_LIMIT = 48 * 1024 * 1024   # raised scoped-VMEM cap (safe on v5e/v6e/v7x)


def _gelu(x):
    # TODO(synk): HF BERT uses exact erf-gelu; tanh approximation kept for robust TPU lowering.
    c = math.sqrt(2.0 / math.pi)
    return 0.5 * x * (1.0 + jnp.tanh(c * (x + 0.044715 * x * x * x)))


def _pick_block(dim, target, align):
    """Largest block <= target that divides dim and is `align`-aligned; else the full dim."""
    if dim <= target:
        return dim
    t = (target // align) * align
    while t >= align:
        if dim % t == 0:
            return t
        t -= align
    return dim


# ---------------------------------------------------------------------------
# Dense layer (+bias, +optional GELU).  Full K / full N, weight VMEM-resident;
# only the row dimension is tiled, so no accumulator scratch is needed.
# ---------------------------------------------------------------------------
def _linear_kernel(x_ref, w_ref, b_ref, o_ref, *, act):
    y = jnp.dot(x_ref[...], w_ref[...],
                preferred_element_type=jnp.float32) + b_ref[...]
    if act == "gelu":
        y = _gelu(y)
    o_ref[...] = y.astype(o_ref.dtype)


def linear(x, w, b, act="none", *, tm=512):
    """x: [M, K] bf16, w: [K, N] bf16, b: [N] f32 -> [M, N] bf16 (f32 accumulation)."""
    M, K = x.shape
    N = w.shape[1]
    bm = _pick_block(M, tm, 16)          # 16-aligned rows for packed bf16 sublanes
    kernel = functools.partial(_linear_kernel, act=act)
    cost = pl.CostEstimate(
        flops=2 * M * N * K,
        transcendentals=M * N if act == "gelu" else 0,
        bytes_accessed=2 * (M * K + K * N + M * N) + 4 * N,
    )
    # TODO(synk): on v7x inference builds fp8 weights would double MXU throughput here.
    return pl.pallas_call(
        kernel,
        out_shape=jax.ShapeDtypeStruct((M, N), jnp.bfloat16),
        grid=(M // bm,),
        in_specs=[
            pl.BlockSpec((bm, K), lambda i: (i, 0)),
            pl.BlockSpec((K, N), lambda i: (0, 0)),   # constant index -> weight DMA'd once
            pl.BlockSpec((1, N), lambda i: (0, 0)),
        ],
        out_specs=pl.BlockSpec((bm, N), lambda i: (i, 0)),
        compiler_params=pltpu.CompilerParams(
            dimension_semantics=("parallel",),
            vmem_limit_bytes=_VMEM_LIMIT),
        cost_estimate=cost,
    )(x, w, b.reshape(1, N).astype(jnp.float32))


# ---------------------------------------------------------------------------
# Dense layer with fused residual add + LayerNorm epilogue (full K / full N)
# ---------------------------------------------------------------------------
def _linear_add_ln_kernel(x_ref, w_ref, b_ref, r_ref, g_ref, be_ref, o_ref):
    h = (jnp.dot(x_ref[...], w_ref[...], preferred_element_type=jnp.float32)
         + b_ref[...] + r_ref[...].astype(jnp.float32))
    mu = jnp.mean(h, axis=-1, keepdims=True)
    d = h - mu
    var = jnp.mean(d * d, axis=-1, keepdims=True)
    y = d * jax.lax.rsqrt(var + LN_EPS) * g_ref[...] + be_ref[...]
    o_ref[...] = y.astype(o_ref.dtype)


def linear_add_ln(x, w, b, res, gamma, beta, *, tm=512):
    """LayerNorm(x @ w + b + res) over the last dim; weight VMEM-resident, rows tiled."""
    M, K = x.shape
    N = w.shape[1]
    bm = _pick_block(M, tm, 16)
    cost = pl.CostEstimate(
        flops=2 * M * N * K + 8 * M * N,
        transcendentals=M,
        bytes_accessed=2 * (M * K + K * N + 2 * M * N) + 12 * N,
    )
    return pl.pallas_call(
        _linear_add_ln_kernel,
        out_shape=jax.ShapeDtypeStruct((M, N), jnp.bfloat16),
        grid=(M // bm,),
        in_specs=[
            pl.BlockSpec((bm, K), lambda i: (i, 0)),
            pl.BlockSpec((K, N), lambda i: (0, 0)),   # weight resident
            pl.BlockSpec((1, N), lambda i: (0, 0)),
            pl.BlockSpec((bm, N), lambda i: (i, 0)),  # residual
            pl.BlockSpec((1, N), lambda i: (0, 0)),
            pl.BlockSpec((1, N), lambda i: (0, 0)),
        ],
        out_specs=pl.BlockSpec((bm, N), lambda i: (i, 0)),
        compiler_params=pltpu.CompilerParams(
            dimension_semantics=("parallel",),
            vmem_limit_bytes=_VMEM_LIMIT),
        cost_estimate=cost,
    )(x, w, b.reshape(1, N).astype(jnp.float32), res,
      gamma.reshape(1, N).astype(jnp.float32),
      beta.reshape(1, N).astype(jnp.float32))


# ---------------------------------------------------------------------------
# Plain LayerNorm (embeddings) — row-tiled, bf16 input (halved HBM read)
# ---------------------------------------------------------------------------
def _ln_kernel(x_ref, g_ref, b_ref, o_ref):
    h = x_ref[...].astype(jnp.float32)
    mu = jnp.mean(h, axis=-1, keepdims=True)
    d = h - mu
    var = jnp.mean(d * d, axis=-1, keepdims=True)
    y = d * jax.lax.rsqrt(var + LN_EPS) * g_ref[...] + b_ref[...]
    o_ref[...] = y.astype(o_ref.dtype)


def layernorm(x, gamma, beta, *, tm=512):
    M, N = x.shape
    bm = _pick_block(M, tm, 16)
    return pl.pallas_call(
        _ln_kernel,
        out_shape=jax.ShapeDtypeStruct((M, N), jnp.bfloat16),
        grid=(M // bm,),
        in_specs=[
            pl.BlockSpec((bm, N), lambda i: (i, 0)),
            pl.BlockSpec((1, N), lambda i: (0, 0)),
            pl.BlockSpec((1, N), lambda i: (0, 0)),
        ],
        out_specs=pl.BlockSpec((bm, N), lambda i: (i, 0)),
        compiler_params=pltpu.CompilerParams(
            dimension_semantics=("parallel",),
            vmem_limit_bytes=_VMEM_LIMIT),
    )(x, gamma.reshape(1, N).astype(jnp.float32),
      beta.reshape(1, N).astype(jnp.float32))


# ---------------------------------------------------------------------------
# Attention: query-tiled grid, fused-QKV input (no HBM head transposes),
# per-head softmax with scale folded onto Q and normalization on the context.
# ---------------------------------------------------------------------------
def _attn_kernel(q_ref, kv_ref, bias_ref, o_ref, *, nH, dh, scale):
    # q_ref:   (1, tq, 3H) bf16  -- query-tile rows of the fused QKV activation
    # kv_ref:  (1,  S, 3H) bf16  -- full-sequence rows (DMA'd once per batch step)
    # bias_ref:(1,  1,  S) f32   -- additive mask bias
    H = nH * dh
    bias = bias_ref[0]                                     # (1, S) f32
    outs = []
    # TODO(synk): for very long sequences switch to a flash-style online softmax
    # with a KV grid axis; at BERT lengths the (tq, S) per-head scores fit VMEM.
    for h in range(nH):
        q_h = q_ref[0, :, h * dh:(h + 1) * dh] * scale             # (tq, dh) bf16
        k_h = kv_ref[0, :, H + h * dh:H + (h + 1) * dh]            # (S, dh) bf16
        v_h = kv_ref[0, :, 2 * H + h * dh:2 * H + (h + 1) * dh]    # (S, dh) bf16
        s = jax.lax.dot_general(q_h, k_h, (((1,), (1,)), ((), ())),
                                preferred_element_type=jnp.float32)  # (tq, S)
        s = s + bias
        s = s - jnp.max(s, axis=-1, keepdims=True)
        p = jnp.exp(s)
        l = jnp.sum(p, axis=-1, keepdims=True)                      # (tq, 1)
        ctx = jnp.dot(p.astype(jnp.bfloat16), v_h,
                      preferred_element_type=jnp.float32)           # (tq, dh)
        outs.append(ctx / l)                                        # normalize post-PV
    # lane-dense (tq, H) output with heads merged -> unmasked wide stores
    o_ref[0] = jnp.concatenate(outs, axis=-1).astype(o_ref.dtype)


def attention(qkv, bias, *, nH, dh, tq):
    """qkv: [B, S, 3H] bf16 (fused Q|K|V), bias: [B, 1, S] f32 -> [B, S, H] bf16."""
    B, S, H3 = qkv.shape
    H = nH * dh
    kernel = functools.partial(_attn_kernel, nH=nH, dh=dh,
                               scale=1.0 / math.sqrt(dh))
    cost = pl.CostEstimate(
        flops=4 * B * nH * S * S * dh,
        transcendentals=B * nH * S * S,
        bytes_accessed=4 * B * S * H3 + 2 * B * S * H + 4 * B * S,
    )
    return pl.pallas_call(
        kernel,
        out_shape=jax.ShapeDtypeStruct((B, S, H), jnp.bfloat16),
        grid=(B, S // tq),
        in_specs=[
            pl.BlockSpec((1, tq, H3), lambda b, q: (b, q, 0)),   # query tile
            pl.BlockSpec((1, S, H3), lambda b, q: (b, 0, 0)),    # full K/V rows
            pl.BlockSpec((1, 1, S), lambda b, q: (b, 0, 0)),
        ],
        out_specs=pl.BlockSpec((1, tq, H), lambda b, q: (b, q, 0)),
        compiler_params=pltpu.CompilerParams(
            dimension_semantics=("parallel", "parallel"),
            vmem_limit_bytes=_VMEM_LIMIT),
        cost_estimate=cost,
    )(qkv, qkv, bias)


# ---------------------------------------------------------------------------
# Parameter init (deterministic, BERT-style N(0, 0.02)); matmul weights in bf16
# ---------------------------------------------------------------------------
def init_params(key, cfg):
    H, ffn = cfg["H"], cfg["ffn"]

    def nrm_f32(k, shape):
        return 0.02 * jax.random.normal(k, shape, dtype=jnp.float32)

    def nrm(k, shape):
        return nrm_f32(k, shape).astype(jnp.bfloat16)

    keys = jax.random.split(key, 3 + cfg["layers"])
    params = {
        "word_emb": nrm_f32(keys[0], (cfg["vocab"], H)),
        "pos_emb": nrm_f32(keys[1], (cfg["max_pos"], H)),
        "type_emb": nrm_f32(keys[2], (cfg["type_vocab"], H)),
        "emb_ln_g": jnp.ones((H,), jnp.float32),
        "emb_ln_b": jnp.zeros((H,), jnp.float32),
        "layers": [],
    }
    for li in range(cfg["layers"]):
        lk = jax.random.split(keys[3 + li], 6)
        params["layers"].append({
            # fused QKV projection: [H, 3H] = concat(wq | wk | wv) along the output dim
            "w_qkv": jnp.concatenate(
                [nrm(lk[0], (H, H)), nrm(lk[1], (H, H)), nrm(lk[2], (H, H))], axis=1),
            "b_qkv": jnp.zeros((3 * H,), jnp.float32),
            "wo": nrm(lk[3], (H, H)), "bo": jnp.zeros((H,), jnp.float32),
            "ln1_g": jnp.ones((H,), jnp.float32), "ln1_b": jnp.zeros((H,), jnp.float32),
            "wi": nrm(lk[4], (H, ffn)), "bi": jnp.zeros((ffn,), jnp.float32),
            "wf": nrm(lk[5], (ffn, H)), "bf": jnp.zeros((H,), jnp.float32),
            "ln2_g": jnp.ones((H,), jnp.float32), "ln2_b": jnp.zeros((H,), jnp.float32),
        })
    return params


# ---------------------------------------------------------------------------
# Forward: Bert(x, segs, mask) -> top_vec (last hidden states)
# ---------------------------------------------------------------------------
def bert_forward(params, x, segs, mask, cfg):
    B, S = x.shape
    H, nH = cfg["H"], cfg["nH"]
    dh = H // nH
    N = B * S

    # Embedding lookups stay in JAX glue; sum cast to bf16 (half the LN DMA read).
    emb = (jnp.take(params["word_emb"], x, axis=0)
           + params["pos_emb"][None, :S, :]
           + jnp.take(params["type_emb"], segs, axis=0)).astype(jnp.bfloat16)
    h = layernorm(emb.reshape(N, H), params["emb_ln_g"], params["emb_ln_b"])  # bf16 [N,H]

    # Additive mask bias computed once, shared by all layers / heads.
    bias = ((1.0 - mask.astype(jnp.float32)) * _NEG_BIAS).reshape(B, 1, S)
    tq = _pick_block(S, 256, 16)   # query tile for attention

    for lp in params["layers"]:
        # Fused QKV projection (one matmul instead of three).
        qkv = linear(h, lp["w_qkv"], lp["b_qkv"])                  # [N, 3H] bf16
        # Attention reads fused QKV directly (free reshape, no HBM transposes)
        # and writes lane-dense [B, S, H] with heads already merged.
        ctx = attention(qkv.reshape(B, S, 3 * H), bias, nH=nH, dh=dh, tq=tq)
        # Output projection with fused residual + LayerNorm epilogue.
        h = linear_add_ln(ctx.reshape(N, H), lp["wo"], lp["bo"], h,
                          lp["ln1_g"], lp["ln1_b"])
        # Feed-forward: GELU fused in the first matmul, add+LN fused in the second.
        inter = linear(h, lp["wi"], lp["bi"], act="gelu")
        h = linear_add_ln(inter, lp["wf"], lp["bf"], h, lp["ln2_g"], lp["ln2_b"])

    return h.astype(jnp.float32).reshape(B, S, H)  # top_vec


if __name__ == "__main__":
    cfg = dict(vocab=64, max_pos=32, type_vocab=2, H=32, nH=4, ffn=64, layers=2)
    B, S = 2, 8

    root = jax.random.PRNGKey(0)
    kp, kx, ks = jax.random.split(root, 3)
    params = init_params(kp, cfg)

    x = jax.random.randint(kx, (B, S), 0, cfg["vocab"], dtype=jnp.int32)
    segs = jax.random.randint(ks, (B, S), 0, cfg["type_vocab"], dtype=jnp.int32)
    # attention mask: second sequence has two padded positions
    mask = jnp.ones((B, S), dtype=jnp.float32)
    mask = mask.at[1, -2:].set(0.0)

    top_vec = bert_forward(params, x, segs, mask, cfg)
    jax.block_until_ready(top_vec)

    assert top_vec.shape == (B, S, cfg["H"])
    assert top_vec.dtype == jnp.float32
    assert bool(jnp.all(jnp.isfinite(top_vec)))
    print("KERNEL_OK")
</pallas_src>

<mosaic_0001>
module attributes {stable_mosaic.version = 11 : i64} {
  func.func @_ln_kernel(%arg0: i32, %arg1: memref<16x32xbf16, #tpu.memory_space<vmem>>, %arg2: memref<1x32xf32, #tpu.memory_space<vmem>>, %arg3: memref<1x32xf32, #tpu.memory_space<vmem>>, %arg4: memref<16x32xbf16, #tpu.memory_space<vmem>>) attributes {dimension_semantics = [#tpu.dimension_semantics<parallel>], iteration_bounds = array<i64: 1>, scalar_prefetch = 0 : i64, scratch_operands = 0 : i64, tpu.core_type = #tpu.core_type<tc>, window_params = [{transform_indices = @transform_0, window_bounds = array<i64: 16, 32>}, {pipeline_mode = #tpu.pipeline_mode<synchronous>, transform_indices = @transform_1, window_bounds = array<i64: 1, 32>}, {pipeline_mode = #tpu.pipeline_mode<synchronous>, transform_indices = @transform_2, window_bounds = array<i64: 1, 32>}, {transform_indices = @transform_3, window_bounds = array<i64: 16, 32>}]} {
    %c0 = arith.constant 0 : index
    %c0_0 = arith.constant 0 : index
    %0 = vector.load %arg1[%c0, %c0_0] : memref<16x32xbf16, #tpu.memory_space<vmem>>, vector<16x32xbf16>
    %1 = arith.extf %0 : vector<16x32xbf16> to vector<16x32xf32>
    %cst = arith.constant dense<0.000000e+00> : vector<16xf32>
    %2 = vector.multi_reduction <add>, %1, %cst [1] : vector<16x32xf32> to vector<16xf32>
    %3 = vector.shape_cast %2 : vector<16xf32> to vector<16x1xf32>
    %cst_1 = arith.constant 3.200000e+01 : f32
    %4 = vector.broadcast %cst_1 : f32 to vector<16x1xf32>
    %5 = arith.divf %3, %4 : vector<16x1xf32>
    %6 = vector.broadcast %5 : vector<16x1xf32> to vector<16x32xf32>
    %7 = arith.subf %1, %6 : vector<16x32xf32>
    %8 = arith.mulf %7, %7 : vector<16x32xf32>
    %cst_2 = arith.constant dense<0.000000e+00> : vector<16xf32>
    %9 = vector.multi_reduction <add>, %8, %cst_2 [1] : vector<16x32xf32> to vector<16xf32>
    %10 = vector.shape_cast %9 : vector<16xf32> to vector<16x1xf32>
    %cst_3 = arith.constant 3.200000e+01 : f32
    %11 = vector.broadcast %cst_3 : f32 to vector<16x1xf32>
    %12 = arith.divf %10, %11 : vector<16x1xf32>
    %cst_4 = arith.constant 9.99999996E-13 : f32
    %13 = vector.broadcast %cst_4 : f32 to vector<16x1xf32>
    %14 = arith.addf %12, %13 : vector<16x1xf32>
    %15 = math.rsqrt %14 : vector<16x1xf32>
    %16 = vector.broadcast %15 : vector<16x1xf32> to vector<16x32xf32>
    %17 = arith.mulf %7, %16 : vector<16x32xf32>
    %c0_5 = arith.constant 0 : index
    %c0_6 = arith.constant 0 : index
    %18 = vector.load %arg2[%c0_5, %c0_6] : memref<1x32xf32, #tpu.memory_space<vmem>>, vector<1x32xf32>
    %19 = vector.broadcast %18 : vector<1x32xf32> to vector<16x32xf32>
    %20 = arith.mulf %17, %19 : vector<16x32xf32>
    %c0_7 = arith.constant 0 : index
    %c0_8 = arith.constant 0 : index
    %21 = vector.load %arg3[%c0_7, %c0_8] : memref<1x32xf32, #tpu.memory_space<vmem>>, vector<1x32xf32>
    %22 = vector.broadcast %21 : vector<1x32xf32> to vector<16x32xf32>
    %23 = arith.addf %20, %22 : vector<16x32xf32>
    %24 = arith.truncf %23 : vector<16x32xf32> to vector<16x32xbf16>
    %c0_9 = arith.constant 0 : index
    %c0_10 = arith.constant 0 : index
    %25 = vector.load %arg4[%c0_9, %c0_10] : memref<16x32xbf16, #tpu.memory_space<vmem>>, vector<16x32xbf16>
    tpu.vector_store %arg4[%c0_9, %c0_10], %24 {strides = array<i32>} : memref<16x32xbf16, #tpu.memory_space<vmem>>, vector<16x32xbf16>,
    return
  }
  func.func @transform_0(%arg0: i32) -> (i32, i32) {
    %c0_i32 = arith.constant 0 : i32
    %c0_i32_0 = arith.constant 0 : i32
    return %arg0, %c0_i32 : i32, i32
  }
  func.func @transform_1(%arg0: i32) -> (i32, i32) {
    %c0_i32 = arith.constant 0 : i32
    %c0_i32_0 = arith.constant 0 : i32
    %c0_i32_1 = arith.constant 0 : i32
    return %c0_i32, %c0_i32_0 : i32, i32
  }
  func.func @transform_2(%arg0: i32) -> (i32, i32) {
    %c0_i32 = arith.constant 0 : i32
    %c0_i32_0 = arith.constant 0 : i32
    %c0_i32_1 = arith.constant 0 : i32
    return %c0_i32, %c0_i32_0 : i32, i32
  }
  func.func @transform_3(%arg0: i32) -> (i32, i32) {
    %c0_i32 = arith.constant 0 : i32
    %c0_i32_0 = arith.constant 0 : i32
    return %arg0, %c0_i32 : i32, i32
  }
}

</mosaic_0001>

<llo_original>
// kernel: tpu_custom_call.1
$region0: #{tpu_custom_call.1}
  #allocation0 [shape = 'u32[]', space=smem, size = 0x4, offset = 0x4, fixed_abs, tag = 'smem constant byte address 0x4 - core index']
  #allocation1 [shape = 'u32[144,128]{1,0:T(1,128)}', space=vmem, size = 0x12000, scoped, tag = 'internal scratch']
  %s0 = inlined_call_operand.hbm [shape: bf16[16,32], index: 0, kind: input, shape index: {}]
  %s1 = inlined_call_operand.vmem [shape: f32[1,32], index: 1, kind: input, shape index: {}]
  %s2 = inlined_call_operand.vmem [shape: f32[1,32], index: 2, kind: input, shape index: {}]
  %s3 = inlined_call_operand.hbm [shape: bf16[16,32], index: 3, kind: output, shape index: {}]
  %s4 = sld [smem:[#allocation0]]
  $region26: #{tpu_custom_call.1} parent=0
    _
  %s6 = ssub.s32 1, %s4
  %s7 = scalar_select 0, %s6, %s4
  $region1: #{tpu_custom_call.1} parent=0
    #allocation2 [shape = 'u8[4096]{0}', space=vmem, size = 0x1000, scoped, tag = 'input window, operand 0, single buffered']
    #allocation3 [shape = 's32[1]{0}', space=sflag, size = 0x4, scoped, tag = 'scoped memory for tpu_custom_call.1']
    #allocation4 [shape = 's32[1]{0}', space=sflag, size = 0x4, scoped, tag = 'scoped memory for tpu_custom_call.1']
    #allocation5 [shape = 'u8[4096]{0}', space=vmem, size = 0x1000, scoped, tag = 'output window, operand 0, single buffered']
    %8 = vsyncpa [#allocation3], 0
    %9 = vsyncpa [#allocation4], 0
    // Predicated region
    $region2: #{tpu_custom_call.1} parent=1 // pred_check
      _
    $region3: #{tpu_custom_call.1} parent=1 // pred_check_branch
      %11 = sbr.rel (0) target = $region5
    $region4: #{tpu_custom_call.1} parent=1 // pred_region
      %s13 = ssub.s32 128, 128
      %14 = vsyncadd [#allocation3], %s13
      %s15 = sshll.u32 [#allocation2], 4
      %s16 = int_to_ptr.vmem [resolvable:$true] %s15
      %21 = dma.hbm_to_vmem [thread:$0]  %s0, 128, %s16, [#allocation3], 64, 64, 4
    $region5: #{tpu_custom_call.1} parent=1 // pred_fallthru
      _
    // Predicated region
    $region6: #{tpu_custom_call.1} parent=1 // pred_check
      _
    $region7: #{tpu_custom_call.1} parent=1 // pred_check_branch
      %23 = sbr.rel (0) target = $region9
    $region8: #{tpu_custom_call.1} parent=1 // pred_region
      _
    $region9: #{tpu_custom_call.1} parent=1 // pred_fallthru
      _
    // Predicated region
    $region10: #{tpu_custom_call.1} parent=1 // pred_check
      _
    $region11: #{tpu_custom_call.1} parent=1 // pred_check_branch
      %25 = sbr.rel (0) target = $region13
    $region12: #{tpu_custom_call.1} parent=1 // pred_region
      _
    $region13: #{tpu_custom_call.1} parent=1 // pred_fallthru
      _
    // Predicated region
    $region14: #{tpu_custom_call.1} parent=1 // pred_check
      _
    $region15: #{tpu_custom_call.1} parent=1 // pred_check_branch
      %27 = sbr.rel (0) target = $region17
    $region16: #{tpu_custom_call.1} parent=1 // pred_region
      %28 = dma.done [#allocation3], 128
    $region17: #{tpu_custom_call.1} parent=1 // pred_fallthru
      _
    %v29 = vld [vmem:[#allocation2] sm:$0xf]
    %v30 = vld [vmem:[#allocation2 + $0x4] sm:$0xf]
    %v31 = vunpack.c.l.bf16 %v29
    %v32 = vunpack.c.l.bf16 %v30
    %vm33 = vcmask 261120
    %v34 = vsel %vm33, %v31, 0.0
    %35 = vadd.xlane.f32.xlu0 %v34
    %v36 = vpop.xlane.xlu0 %35
    %v37 = vsel %vm33, %v32, 0.0
    %38 = vadd.xlane.f32.xlu0 %v37
    %v39 = vpop.xlane.xlu0 %38
    %v40 = vrcp.pop 32.0
    %v41 = vmul.f32 %v36, %v40
    %v42 = vmul.f32 %v39, %v40
    %v43 = vsub.f32 %v31, %v41
    %v44 = vsub.f32 %v32, %v42
    %v45 = vmul.f32 %v43, %v43
    %v46 = vmul.f32 %v44, %v44
    %v47 = vsel %vm33, %v45, 0.0
    %48 = vadd.xlane.f32.xlu0 %v47
    %v49 = vpop.xlane.xlu0 %48
    %v50 = vsel %vm33, %v46, 0.0
    %51 = vadd.xlane.f32.xlu0 %v50
    %v52 = vpop.xlane.xlu0 %51
    %v53 = vmul.f32 %v49, %v40
    %v54 = vmul.f32 %v52, %v40
    %v55 = vadd.f32 %v53, 1e-12
    %v56 = vadd.f32 %v54, 1e-12
    %v57 = vrsqrt.pop %v55
    %v58 = vrsqrt.pop %v56
    %v59 = vmul.f32 %v43, %v57
    %v60 = vmul.f32 %v44, %v58
    %v61 = vld [vmem:[%s1] sm:$0x1]
    %v63 = vlaneseq
    %v64 = vshrl.u32 %v63, 7
    %v65 = vsub.s32 0, %v64
    %v66 = vrot.slane %v61, %v65
    %v68 = vmul.f32 %v59, %v66
    %v69 = vmul.f32 %v60, %v66
    %v70 = vld [vmem:[%s2] sm:$0x1]
    %v72 = vlaneseq
    %v73 = vshrl.u32 %v72, 7
    %v74 = vsub.s32 0, %v73
    %v75 = vrot.slane %v70, %v74
    %v77 = vadd.f32 %v68, %v75
    %v78 = vadd.f32 %v69, %v75
    %v79 = vpack.c.bf16 %v78, %v77
    %v81 = vunpack.c.l.b16 %v79
    %v82 = vunpack.c.h.b16 %v79
    %v83 = vpack.c.b16 %v81, %v81
    %v84 = vpack.c.b16 %v82, %v82
    %vm87 = vcmask 257024
    %88 = vst.msk [vmem:[#allocation5] sm:$0xf] %vm87, %v83
    %89 = vst.msk [vmem:[#allocation5 + $0x4] sm:$0xf] %vm87, %v84
    // Predicated region
    $region18: #{tpu_custom_call.1} parent=1 // pred_check
      _
    $region19: #{tpu_custom_call.1} parent=1 // pred_check_branch
      %91 = sbr.rel (0) target = $region21
    $region20: #{tpu_custom_call.1} parent=1 // pred_region
      %s93 = ssub.s32 128, 128
      %94 = vsyncadd [#allocation4], %s93
      %s95 = sshll.u32 [#allocation5], 4
      %s96 = int_to_ptr.vmem [resolvable:$true] %s95
      %101 = dma.vmem_to_hbm [thread:$0]  %s96, 128, %s3, [#allocation4], 64, 64, 4
    $region21: #{tpu_custom_call.1} parent=1 // pred_fallthru
      _
    // Predicated region
    $region22: #{tpu_custom_call.1} parent=1 // pred_check
      _
    $region23: #{tpu_custom_call.1} parent=1 // pred_check_branch
      %103 = sbr.rel (0) target = $region25
    $region24: #{tpu_custom_call.1} parent=1 // pred_region
      %104 = dma.done [#allocation4], 128
    $region25: #{tpu_custom_call.1} parent=1 // pred_fallthru
      _
    %105 = vsyncpa [#allocation3], 1
    %106 = vsyncpa [#allocation4], 1

</llo_original>
